<compile_context>
chip_gen: v7x
topology: tpu7x:2x2x1
jax: 0.10.0
libtpu: 0.0.40
codegen_flags: <defaults>
</compile_context>

<pallas_src>
import functools

import jax
import jax.numpy as jnp
from jax.experimental import pallas as pl
from jax.experimental.pallas import tpu as pltpu


# ----------------------------- VMEM budgets ---------------------------------

@functools.lru_cache(maxsize=1)
def _vmem_budget():
    """(vmem_limit_bytes, tile-picker budget) derived from the actual chip."""
    cap = 64 * 1024 * 1024                       # conservative default (v7x)
    try:
        info = pltpu.get_tpu_info()
        cap = int(getattr(info, "vmem_capacity_bytes", cap) or cap)
    except Exception:
        pass
    limit = max(32 * 1024 * 1024, int(cap * 0.75))
    budget = max(12 * 1024 * 1024, int(cap * 0.40))
    return limit, budget


def _pick_row_tile(N, H, W, in_ch, w_elems, cout, *, budget, limit, fused=False):
    """Largest row tile TH (divisor of H) whose conv working set fits VMEM."""
    def footprint(th):
        wb = 2 * 2 * w_elems                                  # bf16 weights, 2 bufs
        inb = 2 * 2 * th * W * in_ch + 2 * 2 * 2 * W * in_ch  # tile + halos, 2 bufs
        oel = (th // 2) * max(W // 2, 1) * cout if fused else th * W * cout
        ob = 2 * 2 * oel                                      # bf16 output, 2 bufs
        accb = 4 * th * W * cout                              # f32 accumulator
        liveb = 2 * th * W * in_ch + 4 * th * W * cout        # operand + dot result
        return wb + inb + ob + accb + liveb

    cands = [t for t in range(1, H + 1) if H % t == 0]
    if fused:
        cands = [t for t in cands if t % 2 == 0]
    if N == 1 and H >= 2:                          # keep >= 2 grid steps for 2-TC chips
        small = [t for t in cands if 2 * t <= H]
        if small:
            cands = small
    cands.sort(reverse=True)
    for th in cands:
        if footprint(th) <= budget:
            return th
    th = min(cands)
    if footprint(th) > limit:
        raise ValueError(
            f"conv3x3 tile cannot fit VMEM: rows={th} footprint={footprint(th)}B "
            f"limit={limit}B")
    return th


def _pick_pool_row_tile(N, Ho, Wo, C, budget):
    cands = [t for t in range(1, Ho + 1) if Ho % t == 0]
    if N == 1 and Ho >= 2:
        small = [t for t in cands if 2 * t <= Ho]
        if small:
            cands = small
    cands.sort(reverse=True)
    for t in cands:
        in_b = 2 * 4 * (2 * t) * (2 * Wo) * C
        out_b = 2 * 4 * t * Wo * C
        live = 4 * 4 * t * Wo * C
        if in_b + out_b + live <= budget:
            return t
    return min(cands)


# ----------------------------- conv3x3 + ReLU (general) ----------------------

def _conv3x3_relu_kernel(xm_ref, xt_ref, xb_ref, w_ref, b_ref, o_ref, acc_ref,
                         *, fuse_pool):
    # xm_ref: (1, TH, W, Cin)  main rows (unpadded)
    # xt_ref: (1, 1,  W, Cin)  row just above the tile (clamped at the border)
    # xb_ref: (1, 1,  W, Cin)  row just below the tile (clamped at the border)
    # w_ref : (3, 3, Cin, Cout) bf16
    # b_ref : (1, 1, Cout)      f32
    # o_ref : (1, TH, W, Cout) or (1, TH/2, W/2, Cout) when pooling is fused
    # acc_ref: VMEM (TH, W, Cout) f32 scratch
    _, TH, W, Cin = xm_ref.shape
    Cout = w_ref.shape[3]
    j = pl.program_id(1)
    last = pl.num_programs(1) - 1

    acc_ref[...] = jnp.zeros_like(acc_ref)

    # Accumulate the three column taps of weight-row `dy` from `rows`
    # (nrows, W, Cin) into accumulator rows [r0, r0+nrows).  Column padding
    # is realised by the (c0:c1) / (s0:s1) static sub-ranges (no VMEM pad copy).
    def add_rows(rows, r0, nrows, dy):
        for dx, (c0, c1, s0, s1) in enumerate(
                ((1, W, 0, W - 1), (0, W, 0, W), (0, W - 1, 1, W))):
            wc = c1 - c0
            if wc <= 0:
                continue
            lhs = rows[:, s0:s1, :].reshape(nrows * wc, Cin)
            contrib = jnp.dot(lhs, w_ref[dy, dx],
                              preferred_element_type=jnp.float32)
            acc_ref[r0:r0 + nrows, c0:c1, :] += contrib.reshape(nrows, wc, Cout)

    xm = xm_ref[0]                                   # (TH, W, Cin)

    add_rows(xm, 0, TH, 1)                           # centre row tap
    if TH > 1:
        add_rows(xm[:TH - 1], 1, TH - 1, 0)          # row-above tap, main rows
        add_rows(xm[1:], 0, TH - 1, 2)               # row-below tap, main rows

    @pl.when(j > 0)                                  # top halo (zero row at j == 0)
    def _():
        add_rows(xt_ref[0], 0, 1, 0)

    @pl.when(j < last)                               # bottom halo (zero row at j == last)
    def _():
        add_rows(xb_ref[0], TH - 1, 1, 2)

    y = jnp.maximum(acc_ref[...] + b_ref[...], 0.0)  # (TH, W, Cout) f32
    if fuse_pool is None:
        o_ref[0] = y.astype(o_ref.dtype)
    else:
        r = y.reshape(TH // 2, 2, W, Cout)
        r = (r[:, 0] + r[:, 1]) if fuse_pool == 'avg' else jnp.maximum(r[:, 0], r[:, 1])
        r = r.reshape(TH // 2, W // 2, 2, Cout)
        if fuse_pool == 'avg':
            p = (r[:, :, 0] + r[:, :, 1]) * 0.25
        else:
            p = jnp.maximum(r[:, :, 0], r[:, :, 1])
        o_ref[0] = p.astype(o_ref.dtype)


def conv3x3_relu(x, w, b, *, fuse_pool=None, row_tile=None):
    """x: (N,H,W,Cin), w: (3,3,Cin,Cout), b: (Cout,)-like.

    Returns relu(conv3x3_same(x, w) + b) in bf16, optionally 2x2-pooled
    (fuse_pool in {'max','avg'})."""
    N, H, W, Cin = x.shape
    Cout = w.shape[-1]
    assert w.shape[:3] == (3, 3, Cin)
    if fuse_pool is not None:
        assert fuse_pool in ('max', 'avg') and H % 2 == 0 and W % 2 == 0

    x = x.astype(jnp.bfloat16)
    w = jnp.asarray(w, jnp.bfloat16)
    b = jnp.asarray(b, jnp.float32).reshape(1, 1, Cout)

    limit, budget = _vmem_budget()
    TH = row_tile if row_tile is not None else _pick_row_tile(
        N, H, W, Cin, 9 * Cin * Cout, Cout,
        budget=budget, limit=limit, fused=fuse_pool is not None)
    assert H % TH == 0
    if fuse_pool is not None:
        assert TH % 2 == 0
    n_tiles = H // TH

    if fuse_pool is None:
        out_shape = jax.ShapeDtypeStruct((N, H, W, Cout), jnp.bfloat16)
        out_spec = pl.BlockSpec((1, TH, W, Cout), lambda n, j: (n, j, 0, 0))
    else:
        out_shape = jax.ShapeDtypeStruct((N, H // 2, W // 2, Cout), jnp.bfloat16)
        out_spec = pl.BlockSpec((1, TH // 2, W // 2, Cout),
                                lambda n, j: (n, j, 0, 0))

    return pl.pallas_call(
        functools.partial(_conv3x3_relu_kernel, fuse_pool=fuse_pool),
        out_shape=out_shape,
        grid_spec=pltpu.PrefetchScalarGridSpec(
            num_scalar_prefetch=0,
            grid=(N, n_tiles),
            in_specs=[
                pl.BlockSpec((1, TH, W, Cin), lambda n, j: (n, j, 0, 0)),
                pl.BlockSpec((1, 1, W, Cin),
                             lambda n, j: (n, jnp.maximum(j * TH - 1, 0), 0, 0)),
                pl.BlockSpec((1, 1, W, Cin),
                             lambda n, j: (n, jnp.minimum((j + 1) * TH, H - 1), 0, 0)),
                pl.BlockSpec((3, 3, Cin, Cout), lambda n, j: (0, 0, 0, 0)),
                pl.BlockSpec((1, 1, Cout), lambda n, j: (0, 0, 0)),
            ],
            out_specs=out_spec,
            scratch_shapes=[pltpu.VMEM((TH, W, Cout), jnp.float32)],
        ),
        compiler_params=pltpu.CompilerParams(
            dimension_semantics=("parallel", "parallel"),
            vmem_limit_bytes=limit),
    )(x, x, x, w, b)


# ----------------------------- conv3x3 + ReLU (tiny Cin, e.g. conv1_1) -------

def _matmul_bias_relu_kernel(p_ref, w_ref, b_ref, o_ref):
    # p_ref: (1, TH, W, K) im2col patches, w_ref: (K, Cout), b_ref: (1,1,Cout)
    _, TH, W, K = p_ref.shape
    Cout = w_ref.shape[1]
    y = jnp.dot(p_ref[0].reshape(TH * W, K), w_ref[...],
                preferred_element_type=jnp.float32)
    y = jnp.maximum(y.reshape(TH, W, Cout) + b_ref[...], 0.0)
    o_ref[0] = y.astype(o_ref.dtype)


def conv3x3_relu_im2col(x, w, b, *, row_tile=None):
    """Small-Cin conv (conv1_1): patches built in the wrapper, one K=9*Cin matmul."""
    N, H, W, Cin = x.shape
    Cout = w.shape[-1]
    K = 9 * Cin
    x = x.astype(jnp.bfloat16)
    xp = jnp.pad(x, ((0, 0), (1, 1), (1, 1), (0, 0)))
    patches = jnp.concatenate(
        [xp[:, dy:dy + H, dx:dx + W, :] for dy in range(3) for dx in range(3)],
        axis=-1)                                               # (N, H, W, 9*Cin)
    wk = jnp.asarray(w, jnp.bfloat16).reshape(K, Cout)
    b2 = jnp.asarray(b, jnp.float32).reshape(1, 1, Cout)

    limit, budget = _vmem_budget()
    TH = row_tile if row_tile is not None else _pick_row_tile(
        N, H, W, K, K * Cout, Cout, budget=budget, limit=limit, fused=False)
    assert H % TH == 0
    n_tiles = H // TH
    return pl.pallas_call(
        _matmul_bias_relu_kernel,
        out_shape=jax.ShapeDtypeStruct((N, H, W, Cout), jnp.bfloat16),
        grid_spec=pltpu.PrefetchScalarGridSpec(
            num_scalar_prefetch=0,
            grid=(N, n_tiles),
            in_specs=[
                pl.BlockSpec((1, TH, W, K), lambda n, j: (n, j, 0, 0)),
                pl.BlockSpec((K, Cout), lambda n, j: (0, 0)),
                pl.BlockSpec((1, 1, Cout), lambda n, j: (0, 0, 0)),
            ],
            out_specs=pl.BlockSpec((1, TH, W, Cout), lambda n, j: (n, j, 0, 0)),
        ),
        compiler_params=pltpu.CompilerParams(
            dimension_semantics=("parallel", "parallel"),
            vmem_limit_bytes=limit),
    )(patches, wk, b2)


# ----------------------------- 2x2 pooling -----------------------------------

def _pool2x2_kernel(x_ref, o_ref, *, avg):
    # x_ref: (1, 2*THo, W, C) natural NHWC block; o_ref: (1, THo, Wo, C)
    _, H2, W, C = x_ref.shape
    tho, wo = H2 // 2, W // 2
    v = x_ref[0].reshape(tho, 2, W, C)
    if avg:
        v = v.astype(jnp.float32)
        r = (v[:, 0] + v[:, 1]).reshape(tho, wo, 2, C)
        p = (r[:, :, 0] + r[:, :, 1]) * 0.25
    else:
        r = jnp.maximum(v[:, 0], v[:, 1]).reshape(tho, wo, 2, C)
        p = jnp.maximum(r[:, :, 0], r[:, :, 1])
    o_ref[0] = p.astype(o_ref.dtype)


def pool2x2(x, mode='max', *, row_tile=None):
    """x: (N,H,W,C) -> (N,H/2,W/2,C) via 2x2/stride-2 max or avg pooling."""
    N, H, W, C = x.shape
    assert H % 2 == 0 and W % 2 == 0, "pool2x2 requires even spatial dims"
    Ho, Wo = H // 2, W // 2
    limit, budget = _vmem_budget()
    THo = row_tile if row_tile is not None else _pick_pool_row_tile(N, Ho, Wo, C, budget)
    assert Ho % THo == 0
    return pl.pallas_call(
        functools.partial(_pool2x2_kernel, avg=(mode == 'avg')),
        out_shape=jax.ShapeDtypeStruct((N, Ho, Wo, C), x.dtype),
        grid_spec=pltpu.PrefetchScalarGridSpec(
            num_scalar_prefetch=0,
            grid=(N, Ho // THo),
            in_specs=[pl.BlockSpec((1, 2 * THo, W, C), lambda n, j: (n, j, 0, 0))],
            out_specs=pl.BlockSpec((1, THo, Wo, C), lambda n, j: (n, j, 0, 0)),
        ),
        compiler_params=pltpu.CompilerParams(
            dimension_semantics=("parallel", "parallel"),
            vmem_limit_bytes=limit),
    )(x)


# ----------------------------- VGG parameters --------------------------------

_VGG_CFG = [
    ('conv1_1',   3,  64), ('conv1_2',  64,  64),
    ('conv2_1',  64, 128), ('conv2_2', 128, 128),
    ('conv3_1', 128, 256), ('conv3_2', 256, 256),
    ('conv3_3', 256, 256), ('conv3_4', 256, 256),
    ('conv4_1', 256, 512), ('conv4_2', 512, 512), ('conv4_3', 512, 512),
]


def init_vgg_params(key):
    params = {}
    for i, (name, cin, cout) in enumerate(_VGG_CFG):
        kw, kb = jax.random.split(jax.random.fold_in(key, i))
        std = (2.0 / (cin * 9)) ** 0.5
        params[name] = (
            jax.random.normal(kw, (3, 3, cin, cout), jnp.float32) * std,
            jax.random.normal(kb, (cout,), jnp.float32) * 0.01,
        )
    return params


def pack_vgg_params(params):
    """Pre-cast weights to bf16 and biases to f32 (1,1,Cout) once."""
    return {name: (jnp.asarray(w, jnp.bfloat16),
                   jnp.asarray(b, jnp.float32).reshape(1, 1, -1))
            for name, (w, b) in params.items()}


# ----------------------------- forward pass ----------------------------------

def vgg_forward(params, x_nchw, out_keys, pool='max'):
    """Matches VGG.forward(x, out_keys) of the PyTorch module (r11..r43)."""
    assert pool in ('max', 'avg')
    x = jnp.transpose(x_nchw, (0, 2, 3, 1))          # NCHW -> NHWC
    out = {}
    out['r11'] = conv3x3_relu_im2col(x, *params['conv1_1'])

    def conv_block(inp, conv_name, pre_key, pool_key):
        # Fuse the pool into the conv epilogue when the pre-pool activation
        # is not requested (saves a full HBM round-trip + a kernel launch).
        if pre_key in out_keys:
            out[pre_key] = conv3x3_relu(inp, *params[conv_name])
            out[pool_key] = pool2x2(out[pre_key], pool)
        else:
            out[pool_key] = conv3x3_relu(inp, *params[conv_name], fuse_pool=pool)
        return out[pool_key]

    p1 = conv_block(out['r11'], 'conv1_2', 'r12', 'p1')
    out['r21'] = conv3x3_relu(p1, *params['conv2_1'])
    p2 = conv_block(out['r21'], 'conv2_2', 'r22', 'p2')
    out['r31'] = conv3x3_relu(p2, *params['conv3_1'])
    out['r32'] = conv3x3_relu(out['r31'], *params['conv3_2'])
    out['r33'] = conv3x3_relu(out['r32'], *params['conv3_3'])
    p3 = conv_block(out['r33'], 'conv3_4', 'r34', 'p3')
    out['r41'] = conv3x3_relu(p3, *params['conv4_1'])
    out['r42'] = conv3x3_relu(out['r41'], *params['conv4_2'])
    out['r43'] = conv3x3_relu(out['r42'], *params['conv4_3'])
    # Return NCHW f32 to match the PyTorch module's output convention.
    return [jnp.transpose(out[k].astype(jnp.float32), (0, 3, 1, 2))
            for k in out_keys]


# ----------------------------- pure-JAX reference ----------------------------

def _conv_ref(x, w, b):
    dn = jax.lax.conv_dimension_numbers(x.shape, w.shape, ('NHWC', 'HWIO', 'NHWC'))
    y = jax.lax.conv_general_dilated(x, w, (1, 1), 'SAME', dimension_numbers=dn)
    return jnp.maximum(y + b, 0.0)


def _pool_ref(x):
    return jax.lax.reduce_window(x, -jnp.inf, jax.lax.max,
                                 (1, 2, 2, 1), (1, 2, 2, 1), 'VALID')


def _avgpool_ref(x):
    return jax.lax.reduce_window(x, 0.0, jax.lax.add,
                                 (1, 2, 2, 1), (1, 2, 2, 1), 'VALID') * 0.25


def _ref_forward(params, x_nchw, out_keys):
    x = jnp.transpose(x_nchw, (0, 2, 3, 1)).astype(jnp.float32)
    out = {}
    out['r11'] = _conv_ref(x, *params['conv1_1'])
    out['r12'] = _conv_ref(out['r11'], *params['conv1_2'])
    out['p1'] = _pool_ref(out['r12'])
    out['r21'] = _conv_ref(out['p1'], *params['conv2_1'])
    out['r22'] = _conv_ref(out['r21'], *params['conv2_2'])
    out['p2'] = _pool_ref(out['r22'])
    out['r31'] = _conv_ref(out['p2'], *params['conv3_1'])
    out['r32'] = _conv_ref(out['r31'], *params['conv3_2'])
    out['r33'] = _conv_ref(out['r32'], *params['conv3_3'])
    out['r34'] = _conv_ref(out['r33'], *params['conv3_4'])
    out['p3'] = _pool_ref(out['r34'])
    out['r41'] = _conv_ref(out['p3'], *params['conv4_1'])
    out['r42'] = _conv_ref(out['r41'], *params['conv4_2'])
    out['r43'] = _conv_ref(out['r42'], *params['conv4_3'])
    return [jnp.transpose(out[k], (0, 3, 1, 2)) for k in out_keys]


# ----------------------------- tests ------------------------------------------

def _check(name, got, ref, rel=5e-2, abs_=1e-1):
    assert got.shape == ref.shape, (name, got.shape, ref.shape)
    tol = abs_ + rel * float(jnp.max(jnp.abs(ref)))
    err = float(jnp.max(jnp.abs(got.astype(jnp.float32) - ref)))
    assert err < tol, (name, err, tol)


if __name__ == "__main__":
    key = jax.random.PRNGKey(0)
    k_x, k_p, k_u = jax.random.split(key, 3)
    x = jax.random.normal(k_x, (2, 3, 16, 16), jnp.float32)      # NCHW like PyTorch
    params = init_vgg_params(k_p)
    packed = pack_vgg_params(params)

    # Forward 1: pre-pool activations requested -> un-fused conv + pool kernels.
    keys_a = ('r11', 'r12', 'p1', 'r22', 'r34', 'r43')
    feats_a = jax.block_until_ready(vgg_forward(packed, x, keys_a))
    refs_a = jax.block_until_ready(_ref_forward(params, x, keys_a))
    for name, a, r in zip(keys_a, feats_a, refs_a):
        _check('fwdA/' + name, a, r)

    # Forward 2: pre-pool activations NOT requested -> fused conv+pool epilogue.
    keys_b = ('p1', 'p2', 'p3', 'r43')
    feats_b = jax.block_until_ready(vgg_forward(packed, x, keys_b))
    refs_b = jax.block_until_ready(_ref_forward(params, x, keys_b))
    for name, a, r in zip(keys_b, feats_b, refs_b):
        _check('fwdB/' + name, a, r)

    # Unit tests: multi-row-tile conv (exercises halo blocks + border zeroing),
    # fused max/avg pooling epilogues, and the stand-alone pool kernel.
    ku1, ku2, ku3 = jax.random.split(k_u, 3)
    xt = jax.random.normal(ku1, (2, 16, 16, 8), jnp.float32)
    wt = jax.random.normal(ku2, (3, 3, 8, 16), jnp.float32) * 0.2
    bt = jax.random.normal(ku3, (16,), jnp.float32) * 0.1
    conv_r = _conv_ref(xt, wt, bt)

    yk = jax.block_until_ready(conv3x3_relu(xt, wt, bt, row_tile=4))
    _check('unit/conv', yk, conv_r)

    yf = jax.block_until_ready(conv3x3_relu(xt, wt, bt, fuse_pool='max', row_tile=4))
    _check('unit/conv+maxpool', yf, _pool_ref(conv_r))

    ya = jax.block_until_ready(conv3x3_relu(xt, wt, bt, fuse_pool='avg', row_tile=4))
    _check('unit/conv+avgpool', ya, _avgpool_ref(conv_r))

    pk = jax.block_until_ready(pool2x2(xt, 'max', row_tile=2))
    assert float(jnp.max(jnp.abs(pk - _pool_ref(xt)))) < 1e-6
    pa = jax.block_until_ready(pool2x2(xt, 'avg', row_tile=2))
    assert float(jnp.max(jnp.abs(pa - _avgpool_ref(xt)))) < 1e-5

    print("KERNEL_OK")
</pallas_src>

<mosaic_0001>
module attributes {stable_mosaic.version = 11 : i64} {
  func.func @_matmul_bias_relu_kernel(%arg0: i32, %arg1: i32, %arg2: memref<1x16x16x27xbf16, #tpu.memory_space<vmem>>, %arg3: memref<27x64xbf16, #tpu.memory_space<vmem>>, %arg4: memref<1x1x64xf32, #tpu.memory_space<vmem>>, %arg5: memref<1x16x16x64xbf16, #tpu.memory_space<vmem>>) attributes {dimension_semantics = [#tpu.dimension_semantics<parallel>, #tpu.dimension_semantics<parallel>], iteration_bounds = array<i64: 2, 1>, scalar_prefetch = 0 : i64, scratch_operands = 0 : i64, tpu.core_type = #tpu.core_type<tc>, window_params = [{transform_indices = @transform_0, window_bounds = array<i64: 1, 16, 16, 27>}, {pipeline_mode = #tpu.pipeline_mode<synchronous>, transform_indices = @transform_1, window_bounds = array<i64: 27, 64>}, {pipeline_mode = #tpu.pipeline_mode<synchronous>, transform_indices = @transform_2, window_bounds = array<i64: 1, 1, 64>}, {transform_indices = @transform_3, window_bounds = array<i64: 1, 16, 16, 64>}]} {
    %c0 = arith.constant 0 : index
    %c0_0 = arith.constant 0 : index
    %c0_1 = arith.constant 0 : index
    %c0_2 = arith.constant 0 : index
    %0 = vector.load %arg2[%c0, %c0_0, %c0_1, %c0_2] : memref<1x16x16x27xbf16, #tpu.memory_space<vmem>>, vector<1x16x16x27xbf16>
    %1 = vector.shape_cast %0 : vector<1x16x16x27xbf16> to vector<16x16x27xbf16>
    %2 = vector.shape_cast %1 : vector<16x16x27xbf16> to vector<256x27xbf16>
    %c0_3 = arith.constant 0 : index
    %c0_4 = arith.constant 0 : index
    %3 = vector.load %arg3[%c0_3, %c0_4] : memref<27x64xbf16, #tpu.memory_space<vmem>>, vector<27x64xbf16>
    %cst = arith.constant dense<0.000000e+00> : vector<256x64xf32>
    %4 = tpu.matmul %2, %3, %cst {dimension_numbers = #tpu.dot_dimension_numbers<[1], [0], [0], [1], [0, 0, 1, 1], [], []>} : vector<256x27xbf16>, vector<27x64xbf16>, vector<256x64xf32> -> vector<256x64xf32>
    %5 = vector.shape_cast %4 : vector<256x64xf32> to vector<16x16x64xf32>
    %c0_5 = arith.constant 0 : index
    %c0_6 = arith.constant 0 : index
    %c0_7 = arith.constant 0 : index
    %6 = vector.load %arg4[%c0_5, %c0_6, %c0_7] : memref<1x1x64xf32, #tpu.memory_space<vmem>>, vector<1x1x64xf32>
    %7 = vector.broadcast %6 : vector<1x1x64xf32> to vector<16x16x64xf32>
    %8 = arith.addf %5, %7 : vector<16x16x64xf32>
    %cst_8 = arith.constant 0.000000e+00 : f32
    %9 = vector.broadcast %cst_8 : f32 to vector<16x16x64xf32>
    %10 = arith.maximumf %8, %9 : vector<16x16x64xf32>
    %11 = arith.truncf %10 : vector<16x16x64xf32> to vector<16x16x64xbf16>
    %c0_9 = arith.constant 0 : index
    %c0_10 = arith.constant 0 : index
    %c0_11 = arith.constant 0 : index
    %c0_12 = arith.constant 0 : index
    %12 = vector.load %arg5[%c0_9, %c0_10, %c0_11, %c0_12] : memref<1x16x16x64xbf16, #tpu.memory_space<vmem>>, vector<1x16x16x64xbf16>
    %13 = vector.shape_cast %12 : vector<1x16x16x64xbf16> to vector<16x16x64xbf16>
    %14 = vector.shape_cast %11 : vector<16x16x64xbf16> to vector<1x16x16x64xbf16>
    tpu.vector_store %arg5[%c0_9, %c0_10, %c0_11, %c0_12], %14 {strides = array<i32>} : memref<1x16x16x64xbf16, #tpu.memory_space<vmem>>, vector<1x16x16x64xbf16>,
    return
  }
  func.func @transform_0(%arg0: i32, %arg1: i32) -> (i32, i32, i32, i32) {
    %c0_i32 = arith.constant 0 : i32
    %c0_i32_0 = arith.constant 0 : i32
    %c0_i32_1 = arith.constant 0 : i32
    return %arg0, %arg1, %c0_i32, %c0_i32_0 : i32, i32, i32, i32
  }
  func.func @transform_1(%arg0: i32, %arg1: i32) -> (i32, i32) {
    %c0_i32 = arith.constant 0 : i32
    %c0_i32_0 = arith.constant 0 : i32
    %c0_i32_1 = arith.constant 0 : i32
    return %c0_i32, %c0_i32_0 : i32, i32
  }
  func.func @transform_2(%arg0: i32, %arg1: i32) -> (i32, i32, i32) {
    %c0_i32 = arith.constant 0 : i32
    %c0_i32_0 = arith.constant 0 : i32
    %c0_i32_1 = arith.constant 0 : i32
    %c0_i32_2 = arith.constant 0 : i32
    return %c0_i32, %c0_i32_0, %c0_i32_1 : i32, i32, i32
  }
  func.func @transform_3(%arg0: i32, %arg1: i32) -> (i32, i32, i32, i32) {
    %c0_i32 = arith.constant 0 : i32
    %c0_i32_0 = arith.constant 0 : i32
    %c0_i32_1 = arith.constant 0 : i32
    return %arg0, %arg1, %c0_i32, %c0_i32_0 : i32, i32, i32, i32
  }
}

</mosaic_0001>

<llo_original>
// kernel: tpu_custom_call.1
$region0: #{tpu_custom_call.1}
  #allocation0 [shape = 'u32[]', space=smem, size = 0x4, offset = 0x4, fixed_abs, tag = 'smem constant byte address 0x4 - core index']
  #allocation1 [shape = 'u32[144,128]{1,0:T(1,128)}', space=vmem, size = 0x12000, scoped, tag = 'internal scratch']
  %s0 = inlined_call_operand.hbm [shape: bf16[2,16,16,27], index: 0, kind: input, shape index: {}]
  %s1 = inlined_call_operand.hbm [shape: bf16[27,64], index: 1, kind: input, shape index: {}]
  %s2 = inlined_call_operand.vmem [shape: f32[1,1,64], index: 2, kind: input, shape index: {}]
  %s3 = inlined_call_operand.hbm [shape: bf16[2,16,16,64], index: 3, kind: output, shape index: {}]
  %s4 = sld [smem:[#allocation0]]
  $region53: #{tpu_custom_call.1} parent=0
    _
  %s6 = ssub.s32 1, %s4
  %s7 = scalar_select 0, %s6, %s4
  $region1: #{tpu_custom_call.1} parent=0
    #allocation2 [shape = 'u8[131072]{0}', space=vmem, size = 0x20000, scoped, tag = 'input window, operand 0']
    #allocation3 [shape = 's32[2]{0}', space=sflag, size = 0x8, scoped, tag = 'scoped memory for tpu_custom_call.1']
    #allocation4 [shape = 's32[2]{0}', space=sflag, size = 0x8, scoped, tag = 'scoped memory for tpu_custom_call.1']
    #allocation5 [shape = 'u8[8192]{0}', space=vmem, size = 0x2000, scoped, tag = 'input window, operand 1, single buffered']
    #allocation6 [shape = 's32[1]{0}', space=sflag, size = 0x4, scoped, tag = 'scoped memory for tpu_custom_call.1']
    #allocation7 [shape = 'u8[131072]{0}', space=vmem, size = 0x20000, scoped, tag = 'output window, operand 0']
    %8 = vsyncpa [#allocation3], 0
    %s9 = scalar_lea.sflag [#allocation3], 1
    %10 = vsyncpa %s9, 0
    %11 = vsyncpa [#allocation6], 0
    %12 = vsyncpa [#allocation4], 0
    %s13 = scalar_lea.sflag [#allocation4], 1
    %14 = vsyncpa %s13, 0
    loop: start=0, step=1, limit=4
    $region2: #{tpu_custom_call.1} parent=1 // loop_pre_header
      _
    $region3: #{tpu_custom_call.1} parent=1 // loop_header
      %s16 = sphi 0, %s20
      %p17 = scmp.ge.s32.totalorder %s16, 4
      %s23 = sphi 0, %s35
      %s24 = sphi 0, %s31
      %s25 = sphi 0, %s23
      %s26 = sphi 0, %s24
      %s27 = sphi 0, %s25
      %s28 = sphi 0, %s26
      %s40 = sphi 0, %s42
      %s43 = sphi 0, %s40
      %s44 = sphi 0, %s43
      %s60 = sphi 0, %s44
      %s64 = sphi 0, %s64
      %s66 = sphi 0, %s64
      %s67 = sphi 0, %s66
      %s81 = sphi 0, %s67
      %s85 = sphi 0, %s85
      %s87 = sphi 0, %s85
      %s88 = sphi 0, %s87
      %s102 = sphi 0, %s88
      %s110 = sphi 0, %s112
      %s113 = sphi 0, %s110
      %s114 = sphi 0, %s113
      %s130 = sphi 0, %s114
    $region4: #{tpu_custom_call.1} parent=1 // loop_header_branch
      %19 = sbr.rel (%p17) target = $region8
    $region5: #{tpu_custom_call.1} parent=1 // loop_body
      %s21 = ssub.s32 %s16, 1
      %s22 = ssub.s32 %s16, 2
      %s29 = sadd.s32 1, %s24
      %p30 = scmp.ge.s32.totalorder %s29, 1
      %s31 = scalar_select %p30, 0, %s29
      %s32 = sadd.s32 1, %s23
      %s33 = scalar_select %p30, %s32, %s23
      %p34 = scmp.ge.s32.totalorder %s33, 2
      %s35 = scalar_select %p34, 0, %s33
      %s36 = ssub.s32 %s23, %s35
      %s37 = ssub.s32 %s24, %s31
      %s38 = sor.u32 %s36, %s37
      %p39 = scmp.eq.s32.totalorder %s38, 0
      %s41 = sadd.s32 %s40, 1
      %s42 = scalar_select %p39, %s40, %s41
      %p45 = pneg %p39
      %p46 = scmp.eq.s32.totalorder %s16, 1
      %p47 = por %p45, %p46
      %p48 = scmp.ne.s32.totalorder %s40, %s43
      %p49 = scmp.eq.s32.totalorder %s16, 0
      %p50 = por %p48, %p49
      %p51 = scmp.ne.s32.totalorder %s40, %s43
      %p52 = scmp.eq.s32.totalorder %s21, 1
      %p53 = por %p51, %p52
      %p54 = scmp.ne.s32.totalorder %s43, %s44
      %p55 = scmp.eq.s32.totalorder %s21, 0
      %p56 = por %p54, %p55
      %p57 = scmp.ne.s32.totalorder %s43, %s44
      %p58 = scmp.eq.s32.totalorder %s22, 1
      %p59 = por %p57, %p58
      %p61 = scmp.ne.s32.totalorder %s44, %s60
      %p62 = scmp.eq.s32.totalorder %s22, 0
      %p63 = por %p61, %p62
      %s65 = sadd.s32 %s64, 1
      %p68 = scmp.eq.s32.totalorder %s16, 1
      %p69 = scmp.ne.s32.totalorder %s64, %s66
      %p70 = scmp.eq.s32.totalorder %s16, 0
      %p71 = por %p69, %p70
      %p72 = scmp.ne.s32.totalorder %s64, %s66
      %p73 = scmp.eq.s32.totalorder %s21, 1
      %p74 = por %p72, %p73
      %p75 = scmp.ne.s32.totalorder %s66, %s67
      %p76 = scmp.eq.s32.totalorder %s21, 0
      %p77 = por %p75, %p76
      %p78 = scmp.ne.s32.totalorder %s66, %s67
      %p79 = scmp.eq.s32.totalorder %s22, 1
      %p80 = por %p78, %p79
      %p82 = scmp.ne.s32.totalorder %s67, %s81
      %p83 = scmp.eq.s32.totalorder %s22, 0
      %p84 = por %p82, %p83
      %s86 = sadd.s32 %s85, 1
      %p89 = scmp.eq.s32.totalorder %s16, 1
      %p90 = scmp.ne.s32.totalorder %s85, %s87
      %p91 = scmp.eq.s32.totalorder %s16, 0
      %p92 = por %p90, %p91
      %p93 = scmp.ne.s32.totalorder %s85, %s87
      %p94 = scmp.eq.s32.totalorder %s21, 1
      %p95 = por %p93, %p94
      %p96 = scmp.ne.s32.totalorder %s87, %s88
      %p97 = scmp.eq.s32.totalorder %s21, 0
      %p98 = por %p96, %p97
      %p99 = scmp.ne.s32.totalorder %s87, %s88
      %p100 = scmp.eq.s32.totalorder %s22, 1
      %p101 = por %p99, %p100
      %p103 = scmp.ne.s32.totalorder %s88, %s102
      %p104 = scmp.eq.s32.totalorder %s22, 0
      %p105 = por %p103, %p104
      %s106 = ssub.s32 %s23, %s35
      %s107 = ssub.s32 %s24, %s31
      %s108 = sor.u32 %s106, %s107
      %p109 = scmp.eq.s32.totalorder %s108, 0
      %s111 = sadd.s32 %s110, 1
      %s112 = scalar_select %p109, %s110, %s111
      %p115 = pneg %p109
      %p116 = scmp.eq.s32.totalorder %s16, 1
      %p117 = por %p115, %p116
      %p118 = scmp.ne.s32.totalorder %s110, %s113
      %p119 = scmp.eq.s32.totalorder %s16, 0
      %p120 = por %p118, %p119
      %p121 = scmp.ne.s32.totalorder %s110, %s113
      %p122 = scmp.eq.s32.totalorder %s21, 1
      %p123 = por %p121, %p122
      %p124 = scmp.ne.s32.totalorder %s113, %s114
      %p125 = scmp.eq.s32.totalorder %s21, 0
      %p126 = por %p124, %p125
      %p127 = scmp.ne.s32.totalorder %s113, %s114
      %p128 = scmp.eq.s32.totalorder %s22, 1
      %p129 = por %p127, %p128
      %p131 = scmp.ne.s32.totalorder %s114, %s130
      %p132 = scmp.eq.s32.totalorder %s22, 0
      %p133 = por %p131, %p132
      %p134 = scmp.le.s32.totalorder 1, %s16
      %p135 = scmp.lt.s32.totalorder %s16, 3
      %p136 = pnand %p134, %p135
      %p137 = pneg %p136
      // Predicated region
      $region9: #{tpu_custom_call.1} parent=5 // pred_check
        _
      $region10: #{tpu_custom_call.1} parent=5 // pred_check_branch
        %139 = sbr.rel (%p136) target = $region12
      $region11: #{tpu_custom_call.1} parent=5 // pred_region
        %s140 = ssub.s32 %s16, 1
        // Predicated region
        $region13: #{tpu_custom_call.1} parent=11 // pred_check
          %p141 = pneg %p77
        $region14: #{tpu_custom_call.1} parent=11 // pred_check_branch
          %143 = sbr.rel (%p141) target = $region16
        $region15: #{tpu_custom_call.1} parent=11 // pred_region
          %s145 = ssub.s32 256, 256
          %146 = vsyncadd [#allocation6], %s145
          %s147 = sshll.u32 [#allocation5], 4
          %s148 = int_to_ptr.vmem [resolvable:$true] %s147
          %153 = dma.hbm_to_vmem [thread:$0]  %s1, 256, %s148, [#allocation6], 64, 64, 4
        $region16: #{tpu_custom_call.1} parent=11 // pred_fallthru
          _
        // Predicated region
        $region17: #{tpu_custom_call.1} parent=11 // pred_check
          %p154 = pneg %p98
        $region18: #{tpu_custom_call.1} parent=11 // pred_check_branch
          %156 = sbr.rel (%p154) target = $region20
        $region19: #{tpu_custom_call.1} parent=11 // pred_region
          _
        $region20: #{tpu_custom_call.1} parent=11 // pred_fallthru
          _
      $region12: #{tpu_custom_call.1} parent=5 // pred_fallthru
        _
      %p157 = scmp.lt.s32.totalorder %s16, 2
      // Predicated region
      $region21: #{tpu_custom_call.1} parent=5 // pred_check
        %p158 = pneg %p157
      $region22: #{tpu_custom_call.1} parent=5 // pred_check_branch
        %160 = sbr.rel (%p158) target = $region24
      $region23: #{tpu_custom_call.1} parent=5 // pred_region
        // Predicated region
        $region25: #{tpu_custom_call.1} parent=23 // pred_check
          %p161 = pneg %p50
        $region26: #{tpu_custom_call.1} parent=23 // pred_check_branch
          %163 = sbr.rel (%p161) target = $region28
        $region27: #{tpu_custom_call.1} parent=23 // pred_region
          %s164 = sand.u32 %s40, 1
          %s165 = scalar_lea.sflag [#allocation3], %s164
          %s166 = sand.u32 %s40, 1
          %s167 = smul.addr %s166, 128
          %s168 = scalar_lea.vmem [#allocation2], %s167
          %s169 = smul.u32 16, %s24
          %s171 = ssub.s32 2048, 2048
          %172 = vsyncadd %s165, %s171
          %s173 = smul.addr %s169, 2
          %s174 = smul.addr %s23, 32
          %s175 = sadd.s32 %s173, %s174
          %s176 = smul.addr %s175, 64
          %s177 = scalar_lea.hbm %s0, %s176
          %s178 = sshll.u32 %s168, 4
          %s179 = int_to_ptr.vmem [resolvable:$true] %s178
          %184 = dma.hbm_to_vmem [thread:$0]  %s177, 2048, %s179, %s165, 64, 64, 4
        $region28: #{tpu_custom_call.1} parent=23 // pred_fallthru
          _
      $region24: #{tpu_custom_call.1} parent=5 // pred_fallthru
        _
      %p185 = scmp.le.s32.totalorder 1, %s16
      %p186 = scmp.lt.s32.totalorder %s16, 3
      %p187 = pnand %p185, %p186
      %p188 = pneg %p187
      // Predicated region
      $region29: #{tpu_custom_call.1} parent=5 // pred_check
        _
      $region30: #{tpu_custom_call.1} parent=5 // pred_check_branch
        %190 = sbr.rel (%p187) target = $region32
      $region31: #{tpu_custom_call.1} parent=5 // pred_region
        %s191 = ssub.s32 %s16, 1
        %s192 = sand.u32 %s43, 1
        %s193 = scalar_lea.sflag [#allocation3], %s192
        %s194 = sand.u32 %s43, 1
        %s195 = smul.addr %s194, 128
        %s196 = scalar_lea.vmem [#allocation2], %s195
        // Predicated region
        $region33: #{tpu_custom_call.1} parent=31 // pred_check
          %p197 = pneg %p56
        $region34: #{tpu_custom_call.1} parent=31 // pred_check_branch
          %199 = sbr.rel (%p197) target = $region36
        $region35: #{tpu_custom_call.1} parent=31 // pred_region
          %200 = dma.done %s193, 2048
        $region36: #{tpu_custom_call.1} parent=31 // pred_fallthru
          _
        // Predicated region
        $region37: #{tpu_custom_call.1} parent=31 // pred_check
          %p201 = pneg %p77
        $region38: #{tpu_custom_call.1} parent=31 // pred_check_branch
          %203 = sbr.rel (%p201) target = $region40
        $region39: #{tpu_custom_call.1} parent=31 // pred_region
          %204 = dma.done [#allocation6], 256
        $region40: #{tpu_custom_call.1} parent=31 // pred_fallthru
          _
        %s205 = sand.u32 %s43, 1
        %s206 = scalar_lea.sflag [#allocation3], %s205
        %s207 = sand.u32 %s43, 1
        %s208 = smul.addr %s207, 128
        %s209 = scalar_lea.vmem [#allocation2], %s208
        %p210 = pneg %p56
        %p211 = pneg %p53
        %p212 = pneg %p77
        %p213 = pneg %p74
        %p214 = pneg %p98
        %p215 = pneg %p95
        %p216 = pneg %p126
        %p217 = pneg %p123
        %s218 = sand.u32 %s113, 1
        %s219 = scalar_lea.sflag [#allocation4], %s218
        %s220 = sand.u32 %s113, 1
        %s221 = smul.addr %s220, 128
        %s222 = scalar_lea.vmem [#allocation7], %s221
        %s223 = smul.u32 16, %s26
        %s224 = smul.u32 16, %s26
        %v226 = vld [vmem:[%s196] sm:$0xf]
        %v227 = vld [vmem:[%s196 + $0x4] sm:$0xf]
        %v228 = vld [vmem:[%s196 + $0x8] sm:$0xf]
        %v229 = vld [vmem:[%s196 + $0xc] sm:$0xf]
        %v230 = vld [vmem:[%s196 + $0x10] sm:$0xf]
        %v231 = vld [vmem:[%s196 + $0x14] sm:$0xf]
        %v232 = vld [vmem:[%s196 + $0x18] sm:$0xf]
        %v233 = vld [vmem:[%s196 + $0x1c] sm:$0xf]
        %v234 = vld [vmem:[%s196 + $0x20] sm:$0xf]
        %v235 = vld [vmem:[%s196 + $0x24] sm:$0xf]
        %v236 = vld [vmem:[%s196 + $0x28] sm:$0xf]
        %v237 = vld [vmem:[%s196 + $0x2c] sm:$0xf]
        %v238 = vld [vmem:[%s196 + $0x30] sm:$0xf]
        %v239 = vld [vmem:[%s196 + $0x34] sm:$0xf]
        %v240 = vld [vmem:[%s196 + $0x38] sm:$0xf]
        %v241 = vld [vmem:[%s196 + $0x3c] sm:$0xf]
        %v242 = vld [vmem:[%s196 + $0x40] sm:$0xf]
        %v243 = vld [vmem:[%s196 + $0x44] sm:$0xf]
        %v244 = vld [vmem:[%s196 + $0x48] sm:$0xf]
        %v245 = vld [vmem:[%s196 + $0x4c] sm:$0xf]
        %v246 = vld [vmem:[%s196 + $0x50] sm:$0xf]
        %v247 = vld [vmem:[%s196 + $0x54] sm:$0xf]
        %v248 = vld [vmem:[%s196 + $0x58] sm:$0xf]
        %v249 = vld [vmem:[%s196 + $0x5c] sm:$0xf]
        %v250 = vld [vmem:[%s196 + $0x60] sm:$0xf]
        %v251 = vld [vmem:[%s196 + $0x64] sm:$0xf]
        %v252 = vld [vmem:[%s196 + $0x68] sm:$0xf]
        %v253 = vld [vmem:[%s196 + $0x6c] sm:$0xf]
        %v254 = vld [vmem:[%s196 + $0x70] sm:$0xf]
        %v255 = vld [vmem:[%s196 + $0x74] sm:$0xf]
        %v256 = vld [vmem:[%s196 + $0x78] sm:$0xf]
        %v257 = vld [vmem:[%s196 + $0x7c] sm:$0xf]
        %v258 = vld [vmem:[#allocation5] sm:$0xf]
        %v259 = vld [vmem:[#allocation5 + $0x4] sm:$0xf]
        %v260 = vld [vmem:[#allocation5 + $0x8] sm:$0xf]
        %v261 = vld [vmem:[#allocation5 + $0xc] sm:$0x3]
        %v294 = vunpack.c.l.b16 %v226
        %v295 = vunpack.c.l.b16 %v227
        %v296 = vunpack.c.l.b16 %v228
        %v297 = vunpack.c.l.b16 %v229
        %v298 = vunpack.c.l.b16 %v230
        %v299 = vunpack.c.l.b16 %v231
        %v300 = vunpack.c.l.b16 %v232
        %v301 = vunpack.c.l.b16 %v233
        %v302 = vunpack.c.l.b16 %v234
        %v303 = vunpack.c.l.b16 %v235
        %v304 = vunpack.c.l.b16 %v236
        %v305 = vunpack.c.l.b16 %v237
        %v306 = vunpack.c.l.b16 %v238
        %v307 = vunpack.c.l.b16 %v239
        %v308 = vunpack.c.l.b16 %v240
        %v309 = vunpack.c.l.b16 %v241
        %v310 = vunpack.c.l.b16 %v242
        %v311 = vunpack.c.l.b16 %v243
        %v312 = vunpack.c.l.b16 %v244
        %v313 = vunpack.c.l.b16 %v245
        %v314 = vunpack.c.l.b16 %v246
        %v315 = vunpack.c.l.b16 %v247
        %v316 = vunpack.c.l.b16 %v248
        %v317 = vunpack.c.l.b16 %v249
        %v318 = vunpack.c.l.b16 %v250
        %v319 = vunpack.c.l.b16 %v251
        %v320 = vunpack.c.l.b16 %v252
        %v321 = vunpack.c.l.b16 %v253
        %v322 = vunpack.c.l.b16 %v254
        %v323 = vunpack.c.l.b16 %v255
        %v324 = vunpack.c.l.b16 %v256
        %v325 = vunpack.c.l.b16 %v257
        %v326 = vpack.c.b16 %v295, %v294
        %v327 = vpack.c.b16 %v297, %v296
        %v328 = vpack.c.b16 %v299, %v298
        %v329 = vpack.c.b16 %v301, %v300
        %v330 = vpack.c.b16 %v303, %v302
        %v331 = vpack.c.b16 %v305, %v304
        %v332 = vpack.c.b16 %v307, %v306
        %v333 = vpack.c.b16 %v309, %v308
        %v334 = vpack.c.b16 %v311, %v310
        %v335 = vpack.c.b16 %v313, %v312
        %v336 = vpack.c.b16 %v315, %v314
        %v337 = vpack.c.b16 %v317, %v316
        %v338 = vpack.c.b16 %v319, %v318
        %v339 = vpack.c.b16 %v321, %v320
        %v340 = vpack.c.b16 %v323, %v322
        %v341 = vpack.c.b16 %v325, %v324
        %v346 = vunpack.c.l.b16 %v258
        %v347 = vunpack.c.l.b16 %v259
        %v348 = vunpack.c.l.b16 %v260
        %v349 = vunpack.c.l.b16 %v261
        %v350 = vpack.c.b16 %v347, %v346
        %v351 = vpack.c.b16 %v349, %v348
        %vm353 = vcmask 220160
        %v355 = vsel %vm353, %v326, 0
        %v358 = vsel %vm353, %v327, 0
        %v361 = vsel %vm353, %v328, 0
        %v364 = vsel %vm353, %v329, 0
        %v367 = vsel %vm353, %v330, 0
        %v370 = vsel %vm353, %v331, 0
        %v373 = vsel %vm353, %v332, 0
        %v376 = vsel %vm353, %v333, 0
        %v379 = vsel %vm353, %v334, 0
        %v382 = vsel %vm353, %v335, 0
        %v385 = vsel %vm353, %v336, 0
        %v388 = vsel %vm353, %v337, 0
        %v391 = vsel %vm353, %v338, 0
        %v394 = vsel %vm353, %v339, 0
        %v397 = vsel %vm353, %v340, 0
        %v400 = vsel %vm353, %v341, 0
        %vm402 = vcmask 1044480
        %vm403 = vcmask 1045504
        %v404 = vsel %vm402, 4294967295, 65535
        %v405 = vsel %vm403, %v404, 0
        %v407 = vand.u32 %v351, %v405
        %409 = vmatprep.subr.bf16.mxu0 0
        %410 = vmatpush1.bf16.msra.mxu0 %v350
        %411 = vmatprep.subr.bf16.mxu0 0
        %412 = vmatpush1.bf16.msra.mxu0 %v407
        %413 = vmatprep.subr.bf16.mxu0 0
        %414 = vmatpush1.bf16.msra.mxu0 0
        %415 = vmatprep.subr.bf16.mxu0 0
        %416 = vmatpush1.bf16.msra.mxu0 0
        %417 = vmatprep.subr.bf16.mxu0 0
        %418 = vmatpush1.bf16.msra.mxu0 0
        %419 = vmatprep.subr.bf16.mxu0 0
        %420 = vmatpush1.bf16.msra.mxu0 0
        %421 = vmatprep.subr.bf16.mxu0 0
        %422 = vmatpush1.bf16.msra.mxu0 0
        %423 = vmatprep.subr.bf16.mxu0 0
        %424 = vmatpush1.bf16.msra.mxu0 0
        %425 = vmatprep.subr.bf16.mxu0 0
        %426 = vmatpush1.bf16.msra.mxu0 0
        %427 = vmatprep.subr.bf16.mxu0 0
        %428 = vmatpush1.bf16.msra.mxu0 0
        %429 = vmatprep.subr.bf16.mxu0 0
        %430 = vmatpush1.bf16.msra.mxu0 0
        %431 = vmatprep.subr.bf16.mxu0 0
        %432 = vmatpush1.bf16.msra.mxu0 0
        %433 = vmatprep.subr.bf16.mxu0 0
        %434 = vmatpush1.bf16.msra.mxu0 0
        %435 = vmatprep.subr.bf16.mxu0 0
        %436 = vmatpush1.bf16.msra.mxu0 0
        %437 = vmatprep.subr.bf16.mxu0 0
        %438 = vmatpush1.bf16.msra.mxu0 0
        %439 = vmatprep.subr.bf16.mxu0 0
        %440 = vmatpush1.bf16.msra.mxu0 0
        %441 = vmatprep.mubr.bf16.mxu0 0
        %442 = vmatmul.mubr.bf16.gmra.mrb[0].mxu0 %v355
        %v443 = vpop.f32.mrb[0].mxu0
        %v444 = vadd.f32 0.0, %v443
        %v445 = vpop.f32.mrb[0].mxu0
        %v446 = vpop.f32.mrb[0].mxu0
        %v447 = vadd.f32 0.0, %v446
        %v448 = vpop.f32.mrb[0].mxu0
        %449 = vmatprep.mubr.bf16.mxu0 0
        %450 = vmatmul.mubr.bf16.gmra.mrb[0].mxu0 %v358
        %v451 = vpop.f32.mrb[0].mxu0
        %v452 = vadd.f32 0.0, %v451
        %v453 = vpop.f32.mrb[0].mxu0
        %v454 = vpop.f32.mrb[0].mxu0
        %v455 = vadd.f32 0.0, %v454
        %v456 = vpop.f32.mrb[0].mxu0
        %457 = vmatprep.mubr.bf16.mxu0 0
        %458 = vmatmul.mubr.bf16.gmra.mrb[0].mxu0 %v361
        %v459 = vpop.f32.mrb[0].mxu0
        %v460 = vadd.f32 0.0, %v459
        %v461 = vpop.f32.mrb[0].mxu0
        %v462 = vpop.f32.mrb[0].mxu0
        %v463 = vadd.f32 0.0, %v462
        %v464 = vpop.f32.mrb[0].mxu0
        %465 = vmatprep.mubr.bf16.mxu0 0
        %466 = vmatmul.mubr.bf16.gmra.mrb[0].mxu0 %v364
        %v467 = vpop.f32.mrb[0].mxu0
        %v468 = vadd.f32 0.0, %v467
        %v469 = vpop.f32.mrb[0].mxu0
        %v470 = vpop.f32.mrb[0].mxu0
        %v471 = vadd.f32 0.0, %v470
        %v472 = vpop.f32.mrb[0].mxu0
        %473 = vmatprep.mubr.bf16.mxu0 0
        %474 = vmatmul.mubr.bf16.gmra.mrb[0].mxu0 %v367
        %v475 = vpop.f32.mrb[0].mxu0
        %v476 = vadd.f32 0.0, %v475
        %v477 = vpop.f32.mrb[0].mxu0
        %v478 = vpop.f32.mrb[0].mxu0
        %v479 = vadd.f32 0.0, %v478
        %v480 = vpop.f32.mrb[0].mxu0
        %481 = vmatprep.mubr.bf16.mxu0 0
        %482 = vmatmul.mubr.bf16.gmra.mrb[0].mxu0 %v370
        %v483 = vpop.f32.mrb[0].mxu0
        %v484 = vadd.f32 0.0, %v483
        %v485 = vpop.f32.mrb[0].mxu0
        %v486 = vpop.f32.mrb[0].mxu0
        %v487 = vadd.f32 0.0, %v486
        %v488 = vpop.f32.mrb[0].mxu0
        %489 = vmatprep.mubr.bf16.mxu0 0
        %490 = vmatmul.mubr.bf16.gmra.mrb[0].mxu0 %v373
        %v491 = vpop.f32.mrb[0].mxu0
        %v492 = vadd.f32 0.0, %v491
        %v493 = vpop.f32.mrb[0].mxu0
        %v494 = vpop.f32.mrb[0].mxu0
        %v495 = vadd.f32 0.0, %v494
        %v496 = vpop.f32.mrb[0].mxu0
        %497 = vmatprep.mubr.bf16.mxu0 0
        %498 = vmatmul.mubr.bf16.gmra.mrb[0].mxu0 %v376
        %v499 = vpop.f32.mrb[0].mxu0
        %v500 = vadd.f32 0.0, %v499
        %v501 = vpop.f32.mrb[0].mxu0
        %v502 = vpop.f32.mrb[0].mxu0
        %v503 = vadd.f32 0.0, %v502
        %v504 = vpop.f32.mrb[0].mxu0
        %505 = vmatprep.mubr.bf16.mxu0 0
        %506 = vmatmul.mubr.bf16.gmra.mrb[0].mxu0 %v379
        %v507 = vpop.f32.mrb[0].mxu0
        %v508 = vadd.f32 0.0, %v507
        %v509 = vpop.f32.mrb[0].mxu0
        %v510 = vpop.f32.mrb[0].mxu0
        %v511 = vadd.f32 0.0, %v510
        %v512 = vpop.f32.mrb[0].mxu0
        %513 = vmatprep.mubr.bf16.mxu0 0
        %514 = vmatmul.mubr.bf16.gmra.mrb[0].mxu0 %v382
        %v515 = vpop.f32.mrb[0].mxu0
        %v516 = vadd.f32 0.0, %v515
        %v517 = vpop.f32.mrb[0].mxu0
        %v518 = vpop.f32.mrb[0].mxu0
        %v519 = vadd.f32 0.0, %v518
        %v520 = vpop.f32.mrb[0].mxu0
        %521 = vmatprep.mubr.bf16.mxu0 0
        %522 = vmatmul.mubr.bf16.gmra.mrb[0].mxu0 %v385
        %v523 = vpop.f32.mrb[0].mxu0
        %v524 = vadd.f32 0.0, %v523
        %v525 = vpop.f32.mrb[0].mxu0
        %v526 = vpop.f32.mrb[0].mxu0
        %v527 = vadd.f32 0.0, %v526
        %v528 = vpop.f32.mrb[0].mxu0
        %529 = vmatprep.mubr.bf16.mxu0 0
        %530 = vmatmul.mubr.bf16.gmra.mrb[0].mxu0 %v388
        %v531 = vpop.f32.mrb[0].mxu0
        %v532 = vadd.f32 0.0, %v531
        %v533 = vpop.f32.mrb[0].mxu0
        %v534 = vpop.f32.mrb[0].mxu0
        %v535 = vadd.f32 0.0, %v534
        %v536 = vpop.f32.mrb[0].mxu0
        %537 = vmatprep.mubr.bf16.mxu0 0
        %538 = vmatmul.mubr.bf16.gmra.mrb[0].mxu0 %v391
        %v539 = vpop.f32.mrb[0].mxu0
        %v540 = vadd.f32 0.0, %v539
        %v541 = vpop.f32.mrb[0].mxu0
        %v542 = vpop.f32.mrb[0].mxu0
        %v543 = vadd.f32 0.0, %v542
        %v544 = vpop.f32.mrb[0].mxu0
        %545 = vmatprep.mubr.bf16.mxu0 0
        %546 = vmatmul.mubr.bf16.gmra.mrb[0].mxu0 %v394
        %v547 = vpop.f32.mrb[0].mxu0
        %v548 = vadd.f32 0.0, %v547
        %v549 = vpop.f32.mrb[0].mxu0
        %v550 = vpop.f32.mrb[0].mxu0
        %v551 = vadd.f32 0.0, %v550
        %v552 = vpop.f32.mrb[0].mxu0
        %553 = vmatprep.mubr.bf16.mxu0 0
        %554 = vmatmul.mubr.bf16.gmra.mrb[0].mxu0 %v397
        %v555 = vpop.f32.mrb[0].mxu0
        %v556 = vadd.f32 0.0, %v555
        %v557 = vpop.f32.mrb[0].mxu0
        %v558 = vpop.f32.mrb[0].mxu0
        %v559 = vadd.f32 0.0, %v558
        %v560 = vpop.f32.mrb[0].mxu0
        %561 = vmatprep.mubr.bf16.mxu0 0
        %562 = vmatmul.mubr.bf16.gmra.mrb[0].mxu0 %v400
        %v563 = vpop.f32.mrb[0].mxu0
        %v564 = vadd.f32 0.0, %v563
        %v565 = vpop.f32.mrb[0].mxu0
        %v566 = vpop.f32.mrb[0].mxu0
        %v567 = vadd.f32 0.0, %v566
        %v568 = vpop.f32.mrb[0].mxu0
        %569 = vdwg.mxu0
        %v570 = vld [vmem:[%s2] sm:$0x1]
        %v572 = vlaneseq
        %v573 = vshrl.u32 %v572, 7
        %v574 = vsub.s32 0, %v573
        %v575 = vrot.slane %v570, %v574
        %v577 = vadd.f32 %v444, %v575
        %v578 = vadd.f32 %v447, %v575
        %v579 = vadd.f32 %v452, %v575
        %v580 = vadd.f32 %v455, %v575
        %v581 = vadd.f32 %v460, %v575
        %v582 = vadd.f32 %v463, %v575
        %v583 = vadd.f32 %v468, %v575
        %v584 = vadd.f32 %v471, %v575
        %v585 = vadd.f32 %v476, %v575
        %v586 = vadd.f32 %v479, %v575
        %v587 = vadd.f32 %v484, %v575
        %v588 = vadd.f32 %v487, %v575
        %v589 = vadd.f32 %v492, %v575
        %v590 = vadd.f32 %v495, %v575
        %v591 = vadd.f32 %v500, %v575
        %v592 = vadd.f32 %v503, %v575
        %v593 = vadd.f32 %v508, %v575
        %v594 = vadd.f32 %v511, %v575
        %v595 = vadd.f32 %v516, %v575
        %v596 = vadd.f32 %v519, %v575
        %v597 = vadd.f32 %v524, %v575
        %v598 = vadd.f32 %v527, %v575
        %v599 = vadd.f32 %v532, %v575
        %v600 = vadd.f32 %v535, %v575
        %v601 = vadd.f32 %v540, %v575
        %v602 = vadd.f32 %v543, %v575
        %v603 = vadd.f32 %v548, %v575
        %v604 = vadd.f32 %v551, %v575
        %v605 = vadd.f32 %v556, %v575
        %v606 = vadd.f32 %v559, %v575
        %v607 = vadd.f32 %v564, %v575
        %v608 = vadd.f32 %v567, %v575
        %v609 = vmax.f32 %v577, 0.0
        %v610 = vmax.f32 %v578, 0.0
        %v611 = vmax.f32 %v579, 0.0
        %v612 = vmax.f32 %v580, 0.0
        %v613 = vmax.f32 %v581, 0.0
        %v614 = vmax.f32 %v582, 0.0
        %v615 = vmax.f32 %v583, 0.0
        %v616 = vmax.f32 %v584, 0.0
        %v617 = vmax.f32 %v585, 0.0
        %v618 = vmax.f32 %v586, 0.0
        %v619 = vmax.f32 %v587, 0.0
        %v620 = vmax.f32 %v588, 0.0
        %v621 = vmax.f32 %v589, 0.0
        %v622 = vmax.f32 %v590, 0.0
        %v623 = vmax.f32 %v591, 0.0
        %v624 = vmax.f32 %v592, 0.0
        %v625 = vmax.f32 %v593, 0.0
        %v626 = vmax.f32 %v594, 0.0
        %v627 = vmax.f32 %v595, 0.0
        %v628 = vmax.f32 %v596, 0.0
        %v629 = vmax.f32 %v597, 0.0
        %v630 = vmax.f32 %v598, 0.0
        %v631 = vmax.f32 %v599, 0.0
        %v632 = vmax.f32 %v600, 0.0
        %v633 = vmax.f32 %v601, 0.0
        %v634 = vmax.f32 %v602, 0.0
        %v635 = vmax.f32 %v603, 0.0
        %v636 = vmax.f32 %v604, 0.0
        %v637 = vmax.f32 %v605, 0.0
        %v638 = vmax.f32 %v606, 0.0
        %v639 = vmax.f32 %v607, 0.0
        %v640 = vmax.f32 %v608, 0.0
        %v641 = vpack.c.bf16 %v610, %v609
        %v642 = vpack.c.bf16 %v612, %v611
        %v643 = vpack.c.bf16 %v614, %v613
        %v644 = vpack.c.bf16 %v616, %v615
        %v645 = vpack.c.bf16 %v618, %v617
        %v646 = vpack.c.bf16 %v620, %v619
        %v647 = vpack.c.bf16 %v622, %v621
        %v648 = vpack.c.bf16 %v624, %v623
        %v649 = vpack.c.bf16 %v626, %v625
        %v650 = vpack.c.bf16 %v628, %v627
        %v651 = vpack.c.bf16 %v630, %v629
        %v652 = vpack.c.bf16 %v632, %v631
        %v653 = vpack.c.bf16 %v634, %v633
        %v654 = vpack.c.bf16 %v636, %v635
        %v655 = vpack.c.bf16 %v638, %v637
        %v656 = vpack.c.bf16 %v640, %v639
        %v673 = vunpack.c.l.b16 %v641
        %v674 = vunpack.c.h.b16 %v641
        %v675 = vunpack.c.l.b16 %v642
        %v676 = vunpack.c.h.b16 %v642
        %v677 = vunpack.c.l.b16 %v643
        %v678 = vunpack.c.h.b16 %v643
        %v679 = vunpack.c.l.b16 %v644
        %v680 = vunpack.c.h.b16 %v644
        %v681 = vunpack.c.l.b16 %v645
        %v682 = vunpack.c.h.b16 %v645
        %v683 = vunpack.c.l.b16 %v646
        %v684 = vunpack.c.h.b16 %v646
        %v685 = vunpack.c.l.b16 %v647
        %v686 = vunpack.c.h.b16 %v647
        %v687 = vunpack.c.l.b16 %v648
        %v688 = vunpack.c.h.b16 %v648
        %v689 = vunpack.c.l.b16 %v649
        %v690 = vunpack.c.h.b16 %v649
        %v691 = vunpack.c.l.b16 %v650
        %v692 = vunpack.c.h.b16 %v650
        %v693 = vunpack.c.l.b16 %v651
        %v694 = vunpack.c.h.b16 %v651
        %v695 = vunpack.c.l.b16 %v652
        %v696 = vunpack.c.h.b16 %v652
        %v697 = vunpack.c.l.b16 %v653
        %v698 = vunpack.c.h.b16 %v653
        %v699 = vunpack.c.l.b16 %v654
        %v700 = vunpack.c.h.b16 %v654
        %v701 = vunpack.c.l.b16 %v655
        %v702 = vunpack.c.h.b16 %v655
        %v703 = vunpack.c.l.b16 %v656
        %v704 = vunpack.c.h.b16 %v656
        %v705 = vpack.c.b16 %v673, %v673
        %v706 = vpack.c.b16 %v674, %v674
        %v707 = vpack.c.b16 %v675, %v675
        %v708 = vpack.c.b16 %v676, %v676
        %v709 = vpack.c.b16 %v677, %v677
        %v710 = vpack.c.b16 %v678, %v678
        %v711 = vpack.c.b16 %v679, %v679
        %v712 = vpack.c.b16 %v680, %v680
        %v713 = vpack.c.b16 %v681, %v681
        %v714 = vpack.c.b16 %v682, %v682
        %v715 = vpack.c.b16 %v683, %v683
        %v716 = vpack.c.b16 %v684, %v684
        %v717 = vpack.c.b16 %v685, %v685
        %v718 = vpack.c.b16 %v686, %v686
        %v719 = vpack.c.b16 %v687, %v687
        %v720 = vpack.c.b16 %v688, %v688
        %v721 = vpack.c.b16 %v689, %v689
        %v722 = vpack.c.b16 %v690, %v690
        %v723 = vpack.c.b16 %v691, %v691
        %v724 = vpack.c.b16 %v692, %v692
        %v725 = vpack.c.b16 %v693, %v693
        %v726 = vpack.c.b16 %v694, %v694
        %v727 = vpack.c.b16 %v695, %v695
        %v728 = vpack.c.b16 %v696, %v696
        %v729 = vpack.c.b16 %v697, %v697
        %v730 = vpack.c.b16 %v698, %v698
        %v731 = vpack.c.b16 %v699, %v699
        %v732 = vpack.c.b16 %v700, %v700
        %v733 = vpack.c.b16 %v701, %v701
        %v734 = vpack.c.b16 %v702, %v702
        %v735 = vpack.c.b16 %v703, %v703
        %v736 = vpack.c.b16 %v704, %v704
        %vm769 = vcmask 519168
        %770 = vst.msk [vmem:[%s222] sm:$0xf] %vm769, %v705
        %771 = vst.msk [vmem:[%s222 + $0x4] sm:$0xf] %vm769, %v706
        %772 = vst.msk [vmem:[%s222 + $0x8] sm:$0xf] %vm769, %v707
        %773 = vst.msk [vmem:[%s222 + $0xc] sm:$0xf] %vm769, %v708
        %774 = vst.msk [vmem:[%s222 + $0x10] sm:$0xf] %vm769, %v709
        %775 = vst.msk [vmem:[%s222 + $0x14] sm:$0xf] %vm769, %v710
        %776 = vst.msk [vmem:[%s222 + $0x18] sm:$0xf] %vm769, %v711
        %777 = vst.msk [vmem:[%s222 + $0x1c] sm:$0xf] %vm769, %v712
        %778 = vst.msk [vmem:[%s222 + $0x20] sm:$0xf] %vm769, %v713
        %779 = vst.msk [vmem:[%s222 + $0x24] sm:$0xf] %vm769, %v714
        %780 = vst.msk [vmem:[%s222 + $0x28] sm:$0xf] %vm769, %v715
        %781 = vst.msk [vmem:[%s222 + $0x2c] sm:$0xf] %vm769, %v716
        %782 = vst.msk [vmem:[%s222 + $0x30] sm:$0xf] %vm769, %v717
        %783 = vst.msk [vmem:[%s222 + $0x34] sm:$0xf] %vm769, %v718
        %784 = vst.msk [vmem:[%s222 + $0x38] sm:$0xf] %vm769, %v719
        %785 = vst.msk [vmem:[%s222 + $0x3c] sm:$0xf] %vm769, %v720
        %786 = vst.msk [vmem:[%s222 + $0x40] sm:$0xf] %vm769, %v721
        %787 = vst.msk [vmem:[%s222 + $0x44] sm:$0xf] %vm769, %v722
        %788 = vst.msk [vmem:[%s222 + $0x48] sm:$0xf] %vm769, %v723
        %789 = vst.msk [vmem:[%s222 + $0x4c] sm:$0xf] %vm769, %v724
        %790 = vst.msk [vmem:[%s222 + $0x50] sm:$0xf] %vm769, %v725
        %791 = vst.msk [vmem:[%s222 + $0x54] sm:$0xf] %vm769, %v726
        %792 = vst.msk [vmem:[%s222 + $0x58] sm:$0xf] %vm769, %v727
        %793 = vst.msk [vmem:[%s222 + $0x5c] sm:$0xf] %vm769, %v728
        %794 = vst.msk [vmem:[%s222 + $0x60] sm:$0xf] %vm769, %v729
        %795 = vst.msk [vmem:[%s222 + $0x64] sm:$0xf] %vm769, %v730
        %796 = vst.msk [vmem:[%s222 + $0x68] sm:$0xf] %vm769, %v731
        %797 = vst.msk [vmem:[%s222 + $0x6c] sm:$0xf] %vm769, %v732
        %798 = vst.msk [vmem:[%s222 + $0x70] sm:$0xf] %vm769, %v733
        %799 = vst.msk [vmem:[%s222 + $0x74] sm:$0xf] %vm769, %v734
        %800 = vst.msk [vmem:[%s222 + $0x78] sm:$0xf] %vm769, %v735
        %801 = vst.msk [vmem:[%s222 + $0x7c] sm:$0xf] %vm769, %v736
        %s802 = sand.u32 %s113, 1
        %s803 = scalar_lea.sflag [#allocation4], %s802
        %s804 = sand.u32 %s113, 1
        %s805 = smul.addr %s804, 128
        %s806 = scalar_lea.vmem [#allocation7], %s805
        // Predicated region
        $region41: #{tpu_custom_call.1} parent=31 // pred_check
          %p807 = pneg %p123
        $region42: #{tpu_custom_call.1} parent=31 // pred_check_branch
          %809 = sbr.rel (%p807) target = $region44
        $region43: #{tpu_custom_call.1} parent=31 // pred_region
          %s810 = smul.u32 16, %s26
          %s812 = ssub.s32 2048, 2048
          %813 = vsyncadd %s803, %s812
          %s814 = smul.addr %s810, 2
          %s815 = smul.addr %s25, 32
          %s816 = sadd.s32 %s814, %s815
          %s817 = smul.addr %s816, 64
          %s818 = scalar_lea.hbm %s3, %s817
          %s819 = sshll.u32 %s806, 4
          %s820 = int_to_ptr.vmem [resolvable:$true] %s819
          %825 = dma.vmem_to_hbm [thread:$0]  %s820, 2048, %s818, %s803, 64, 64, 4
        $region44: #{tpu_custom_call.1} parent=31 // pred_fallthru
          _
      $region32: #{tpu_custom_call.1} parent=5 // pred_fallthru
        _
      %p826 = scmp.le.s32.totalorder 2, %s16
      // Predicated region
      $region45: #{tpu_custom_call.1} parent=5 // pred_check
        %p827 = pneg %p826
      $region46: #{tpu_custom_call.1} parent=5 // pred_check_branch
        %829 = sbr.rel (%p827) target = $region48
      $region47: #{tpu_custom_call.1} parent=5 // pred_region
        %s830 = ssub.s32 %s16, 2
        // Predicated region
        $region49: #{tpu_custom_call.1} parent=47 // pred_check
          %p831 = pneg %p129
        $region50: #{tpu_custom_call.1} parent=47 // pred_check_branch
          %833 = sbr.rel (%p831) target = $region52
        $region51: #{tpu_custom_call.1} parent=47 // pred_region
          %s834 = sand.u32 %s114, 1
          %s835 = scalar_lea.sflag [#allocation4], %s834
          %s836 = sand.u32 %s114, 1
          %s837 = smul.addr %s836, 128
          %s838 = scalar_lea.vmem [#allocation7], %s837
          %839 = dma.done %s835, 2048
        $region52: #{tpu_custom_call.1} parent=47 // pred_fallthru
          _
      $region48: #{tpu_custom_call.1} parent=5 // pred_fallthru
        _
    $region6: #{tpu_custom_call.1} parent=1 // loop_footer
      %s20 = sadd.s32 1, %s16
    $region7: #{tpu_custom_call.1} parent=1 // loop_footer_branch
      %15 = sbr.rel target = $region3
    $region8: #{tpu_custom_call.1} parent=1 // loop_exit
      _
    %840 = vsyncpa [#allocation3], 1
    %s841 = scalar_lea.sflag [#allocation3], 1
    %842 = vsyncpa %s841, 1
    %843 = vsyncpa [#allocation6], 1
    %844 = vsyncpa [#allocation4], 1
    %s845 = scalar_lea.sflag [#allocation4], 1
    %846 = vsyncpa %s845, 1

</llo_original>
